<compile_context>
chip_gen: v5e
topology: v5e:2x2
jax: 0.10.0
libtpu: 0.0.40
codegen_flags: <defaults>
</compile_context>

<pallas_src>
import functools

import jax
import jax.numpy as jnp
from jax.experimental import pallas as pl
from jax.experimental.pallas import tpu as pltpu


def _channel_attention_kernel(x_ref, w1_ref, b1_ref, w2_ref, b2_ref,
                              o_ref, acc_ref, *, inv_hw, lane_chunks):
    """Grid = (B_tiles, HW_tiles); HW (axis 1) is the innermost reduction axis.

    x_ref  : [TB, C, THW]      current spatial tile (THW = lane_chunks * 128)
    w1_ref : [C, Hid]          fc1 weight, pre-transposed to (in, out)
    b1_ref : [1, Hid]
    w2_ref : [Hid, C]          fc2 weight, pre-transposed to (in, out)
    b2_ref : [1, C]
    o_ref  : [TB, C]           sigmoid gate, written once at the last HW step
    acc_ref: [TB, C, 128] f32  lane-wide partial-sum accumulator
    """
    hw = pl.program_id(1)

    @pl.when(hw == 0)
    def _():
        acc_ref[...] = jnp.zeros_like(acc_ref)

    # Steady state: fold the lane-chunks of this tile with plain VALU adds.
    # Static, lane-tile-aligned 128-wide slices -> no relayout, no XLU work.
    # f32 upcast keeps the reduction on f32 VALU paths (v5e has no bf16 VPU).
    partial = x_ref[:, :, 0:128].astype(jnp.float32)
    for j in range(1, lane_chunks):
        partial = partial + x_ref[:, :, j * 128:(j + 1) * 128].astype(jnp.float32)
    acc_ref[...] += partial

    @pl.when(hw == pl.num_programs(1) - 1)
    def _():
        # Single cross-lane (XLU) reduce, once per batch tile.
        pooled = jnp.sum(acc_ref[...], axis=-1) * inv_hw            # [TB, C]
        h = jnp.dot(pooled, w1_ref[...],
                    preferred_element_type=jnp.float32) + b1_ref[...]
        h = jnp.maximum(h, 0.0)                                     # ReLU
        y = jnp.dot(h, w2_ref[...],
                    preferred_element_type=jnp.float32) + b2_ref[...]
        o_ref[...] = jax.nn.sigmoid(y).astype(o_ref.dtype)


def _min_sublane(dtype):
    # Min second-to-last tile dim for the output block: 8 (f32) / 16 (bf16) /
    # 32 (int8/fp8). A full-dim block (TB == B) is always legal.
    return {4: 8, 2: 16, 1: 32}.get(jnp.dtype(dtype).itemsize, 8)


def _vmem_budget():
    """(per-x-buffer budget bytes, physical VMEM bytes) for this generation."""
    try:
        kind = jax.devices()[0].device_kind.lower()
    except Exception:  # pragma: no cover - be robust to odd environments
        kind = ""
    if "v7" in kind:
        return 12 << 20, 64 << 20     # 2x12 MiB + params/acc fits 64 MiB/TC
    if "v6" in kind:
        return 13 << 20, 128 << 20    # comfortably inside the 32 MiB scoped default
    return 6 << 20, 128 << 20         # v5e / unknown: tightest (16 MiB) default


def _pick_batch_tile(B, min_sub):
    # Smallest legal TB: maximizes B//TB (v7x megacore) and leaves the VMEM
    # budget to THW (longer contiguous DMA runs per row).
    if B <= min_sub:
        return B
    t = min_sub
    while t < B:
        if B % t == 0:
            return t
        t += min_sub
    return B


def _pick_hw_tile(HW, row_bytes, budget_bytes):
    # THW = 128 * d where d divides ceil(HW/128): tiles stay lane-dense, the
    # only padding needed is the minimal 128-alignment padding, and the x tile
    # stays within the per-buffer VMEM budget. If even one 128-chunk exceeds
    # the budget (huge TB*C), fall back to the minimum legal THW=128 -- the
    # explicit vmem_limit below then makes any true overflow a loud failure.
    m = -(-HW // 128)                                  # ceil(HW / 128)
    cap_chunks = max(1, budget_bytes // max(row_bytes * 128, 1))
    best = 1
    for d in range(1, m + 1):
        if m % d == 0 and d <= cap_chunks:
            best = d
    return 128 * best


def prepare_channel_attention_params(w1, b1, w2, b2):
    """One-time parameter prep (PyTorch Linear layout [out, in] -> (in, out)).

    Call once at model-setup time so no transpose/copy sits on the forward
    critical path."""
    w1 = jnp.asarray(w1)
    w2 = jnp.asarray(w2)
    hidden, C = w1.shape
    return (w1.T.reshape(C, hidden),
            jnp.asarray(b1).reshape(1, hidden),
            w2.T.reshape(hidden, C),
            jnp.asarray(b2).reshape(1, C))


def channel_attention(x, w1t, b1r, w2t, b2r, *, hw_tile=None, batch_tile=None):
    """x: [B, C, H, W] (NCHW). Params from prepare_channel_attention_params.
    Returns the gate, shape [B, C, 1, 1]."""
    B, C, H, W = x.shape
    hidden = w1t.shape[1]
    HW = H * W
    itemsize = jnp.dtype(x.dtype).itemsize
    min_sub = _min_sublane(x.dtype)

    budget, vmem_phys = _vmem_budget()

    # --- co-select (TB, THW) against the VMEM budget: small TB, big THW ---
    TB = batch_tile if batch_tile is not None else _pick_batch_tile(B, min_sub)
    assert B % TB == 0, "batch tile must divide B"
    assert TB == B or TB % min_sub == 0, \
        "batch tile must be a multiple of the sublane tile (or the full batch)"

    if hw_tile is None:
        THW = _pick_hw_tile(HW, TB * C * itemsize, budget)
    else:
        assert hw_tile % 128 == 0, "hw_tile must be a multiple of 128"
        THW = hw_tile

    HW_total = -(-HW // THW) * THW
    grid = (B // TB, HW_total // THW)
    # TODO(synk): when B // TB == 1 (tiny batch) only one v7x TensorCore runs;
    # a parallel HW split + tiny combine pass would recover the second core.
    inv_hw = 1.0 / float(HW)          # divide by the TRUE H*W (zero-pad is exact)
    lane_chunks = THW // 128

    x3 = x.reshape(B, C, HW)
    if HW_total != HW:
        # Zero-pad the spatial axis so every DMA tile is full and lane-dense;
        # the accumulated sum is unchanged by trailing zeros.
        x3 = jnp.pad(x3, ((0, 0), (0, 0), (0, HW_total - HW)))

    # Explicit VMEM limit: double-buffered x tiles + resident params + the
    # lane-wide f32 accumulator + upcast temporaries + margin, capped below
    # physical VMEM -> budget overruns fail loudly at compile time.
    x_tile_bytes = TB * C * THW * itemsize
    param_bytes = (C * hidden + hidden * C + hidden + C) * 4
    acc_bytes = TB * C * 128 * 4
    upcast_slack = 2 * TB * C * 128 * 4
    needed = (2 * x_tile_bytes + 2 * param_bytes + acc_bytes + upcast_slack
              + 2 * TB * C * itemsize + (2 << 20))
    vmem_limit = int(min(vmem_phys * 0.85, max(needed, 16 << 20)))

    kernel = functools.partial(_channel_attention_kernel, inv_hw=inv_hw,
                               lane_chunks=lane_chunks)

    out = pl.pallas_call(
        kernel,
        out_shape=jax.ShapeDtypeStruct((B, C), x.dtype),
        grid=grid,
        in_specs=[
            # x tile: walks the spatial axis; full C keeps layout legal for
            # any channel count, THW multiple of 128 keeps DMAs lane-dense.
            pl.BlockSpec((TB, C, THW), lambda b, hw: (b, 0, hw)),
            # Weights / biases: constant index maps -> fetched once, resident
            # across the whole spatial reduction.
            pl.BlockSpec((C, hidden), lambda b, hw: (0, 0)),
            pl.BlockSpec((1, hidden), lambda b, hw: (0, 0)),
            pl.BlockSpec((hidden, C), lambda b, hw: (0, 0)),
            pl.BlockSpec((1, C), lambda b, hw: (0, 0)),
        ],
        # Output block index is constant along the HW axis (accumulator).
        out_specs=pl.BlockSpec((TB, C), lambda b, hw: (b, 0)),
        scratch_shapes=[pltpu.VMEM((TB, C, 128), jnp.float32)],
        compiler_params=pltpu.CompilerParams(
            dimension_semantics=("parallel", "arbitrary"),
            vmem_limit_bytes=vmem_limit),
    )(x3, w1t, b1r, w2t, b2r)

    return out.reshape(B, C, 1, 1)


def channel_attention_ref(x, w1, b1, w2, b2):
    """Pure-JAX reference mirroring the PyTorch module."""
    B, C, H, W = x.shape
    pooled = jnp.mean(x, axis=(2, 3))                  # [B, C]
    h = jnp.maximum(pooled @ w1.T + b1, 0.0)           # [B, hidden]
    y = h @ w2.T + b2                                  # [B, C]
    return jax.nn.sigmoid(y).reshape(B, C, 1, 1)


if __name__ == "__main__":
    # Shapes consistent with the module: in_channels=32, reduction=16 -> hidden=2
    B, C, H, W = 2, 32, 16, 16
    reduction = 16
    hidden = C // reduction

    key = jax.random.PRNGKey(0)
    kx, k1, k2, k3, k4, kx2 = jax.random.split(key, 6)

    x = jax.random.normal(kx, (B, C, H, W), dtype=jnp.float32)

    # Deterministic synthetic parameters (PyTorch Linear layout: [out, in])
    w1 = jax.random.normal(k1, (hidden, C), dtype=jnp.float32) * 0.1
    b1 = jax.random.normal(k2, (hidden,), dtype=jnp.float32) * 0.1
    w2 = jax.random.normal(k3, (C, hidden), dtype=jnp.float32) * 0.1
    b2 = jax.random.normal(k4, (C,), dtype=jnp.float32) * 0.1

    # One-time parameter prep (hoisted off the forward path).
    params = prepare_channel_attention_params(w1, b1, w2, b2)

    ref = channel_attention_ref(x, w1, b1, w2, b2)

    # Auto-picked tiling (single spatial step at this small size).
    out = jax.block_until_ready(channel_attention(x, *params))
    assert out.shape == (B, C, 1, 1)
    assert jnp.allclose(out, ref, atol=1e-5, rtol=1e-5)

    # Forced multi-step spatial reduction: exercises the VMEM accumulator /
    # pl.when init+finalize path that large feature maps will take.
    out_tiled = jax.block_until_ready(
        channel_attention(x, *params, hw_tile=128))
    assert jnp.allclose(out_tiled, ref, atol=1e-5, rtol=1e-5)

    # Spatial size not a multiple of 128: exercises the zero-padding path
    # (sum over zeros divided by the true H*W stays exact).
    x2 = jax.random.normal(kx2, (B, C, 10, 10), dtype=jnp.float32)
    ref2 = channel_attention_ref(x2, w1, b1, w2, b2)
    out2 = jax.block_until_ready(channel_attention(x2, *params))
    assert jnp.allclose(out2, ref2, atol=1e-5, rtol=1e-5)

    print("KERNEL_OK")
</pallas_src>

<mosaic_0001>
module attributes {stable_mosaic.version = 11 : i64} {
  func.func @_channel_attention_kernel(%arg0: i32, %arg1: i32, %arg2: memref<2x32x256xf32, #tpu.memory_space<vmem>>, %arg3: memref<32x2xf32, #tpu.memory_space<vmem>>, %arg4: memref<1x2xf32, #tpu.memory_space<vmem>>, %arg5: memref<2x32xf32, #tpu.memory_space<vmem>>, %arg6: memref<1x32xf32, #tpu.memory_space<vmem>>, %arg7: memref<2x32xf32, #tpu.memory_space<vmem>>, %arg8: memref<2x32x128xf32, #tpu.memory_space<vmem>>) attributes {dimension_semantics = [#tpu.dimension_semantics<parallel>, #tpu.dimension_semantics<arbitrary>], iteration_bounds = array<i64: 1, 1>, scalar_prefetch = 0 : i64, scratch_operands = 1 : i64, tpu.core_type = #tpu.core_type<tc>, window_params = [{transform_indices = @transform_0, window_bounds = array<i64: 2, 32, 256>}, {pipeline_mode = #tpu.pipeline_mode<synchronous>, transform_indices = @transform_1, window_bounds = array<i64: 32, 2>}, {pipeline_mode = #tpu.pipeline_mode<synchronous>, transform_indices = @transform_2, window_bounds = array<i64: 1, 2>}, {pipeline_mode = #tpu.pipeline_mode<synchronous>, transform_indices = @transform_3, window_bounds = array<i64: 2, 32>}, {pipeline_mode = #tpu.pipeline_mode<synchronous>, transform_indices = @transform_4, window_bounds = array<i64: 1, 32>}, {transform_indices = @transform_5, window_bounds = array<i64: 2, 32>}]} {
    %c0_i32 = arith.constant 0 : i32
    %0 = arith.cmpi eq, %arg1, %c0_i32 : i32
    %1 = arith.extui %0 : i1 to i32
    %c0_i32_0 = arith.constant 0 : i32
    %2 = arith.cmpi ne, %1, %c0_i32_0 : i32
    scf.if %2 {
      %cst = arith.constant 0.000000e+00 : f32
      %12 = vector.broadcast %cst : f32 to vector<2x32x128xf32>
      %c0_13 = arith.constant 0 : index
      %c0_14 = arith.constant 0 : index
      %c0_15 = arith.constant 0 : index
      %13 = vector.load %arg8[%c0_13, %c0_14, %c0_15] : memref<2x32x128xf32, #tpu.memory_space<vmem>>, vector<2x32x128xf32>
      tpu.vector_store %arg8[%c0_13, %c0_14, %c0_15], %12 {strides = array<i32>} : memref<2x32x128xf32, #tpu.memory_space<vmem>>, vector<2x32x128xf32>,
    } else {
    }
    %c0 = arith.constant 0 : index
    %c0_1 = arith.constant 0 : index
    %c0_2 = arith.constant 0 : index
    %3 = vector.load %arg2[%c0, %c0_1, %c0_2] : memref<2x32x256xf32, #tpu.memory_space<vmem>>, vector<2x32x128xf32>
    %c0_3 = arith.constant 0 : index
    %c0_4 = arith.constant 0 : index
    %c128 = arith.constant 128 : index
    %4 = vector.load %arg2[%c0_3, %c0_4, %c128] : memref<2x32x256xf32, #tpu.memory_space<vmem>>, vector<2x32x128xf32>
    %5 = arith.addf %3, %4 : vector<2x32x128xf32>
    %c0_5 = arith.constant 0 : index
    %c0_6 = arith.constant 0 : index
    %c0_7 = arith.constant 0 : index
    %6 = vector.load %arg8[%c0_5, %c0_6, %c0_7] : memref<2x32x128xf32, #tpu.memory_space<vmem>>, vector<2x32x128xf32>
    %7 = arith.addf %6, %5 : vector<2x32x128xf32>
    %c0_8 = arith.constant 0 : index
    %c0_9 = arith.constant 0 : index
    %c0_10 = arith.constant 0 : index
    %8 = vector.load %arg8[%c0_8, %c0_9, %c0_10] : memref<2x32x128xf32, #tpu.memory_space<vmem>>, vector<2x32x128xf32>
    tpu.vector_store %arg8[%c0_8, %c0_9, %c0_10], %7 {strides = array<i32>} : memref<2x32x128xf32, #tpu.memory_space<vmem>>, vector<2x32x128xf32>,
    %c0_i32_11 = arith.constant 0 : i32
    %9 = arith.cmpi eq, %arg1, %c0_i32_11 : i32
    %10 = arith.extui %9 : i1 to i32
    %c0_i32_12 = arith.constant 0 : i32
    %11 = arith.cmpi ne, %10, %c0_i32_12 : i32
    scf.if %11 {
      %c0_13 = arith.constant 0 : index
      %c0_14 = arith.constant 0 : index
      %c0_15 = arith.constant 0 : index
      %12 = vector.load %arg8[%c0_13, %c0_14, %c0_15] : memref<2x32x128xf32, #tpu.memory_space<vmem>>, vector<2x32x128xf32>
      %cst = arith.constant dense<0.000000e+00> : vector<2x32xf32>
      %13 = vector.multi_reduction <add>, %12, %cst [2] : vector<2x32x128xf32> to vector<2x32xf32>
      %cst_16 = arith.constant 3.906250e-03 : f32
      %14 = vector.broadcast %cst_16 : f32 to vector<2x32xf32>
      %15 = arith.mulf %13, %14 : vector<2x32xf32>
      %c0_17 = arith.constant 0 : index
      %c0_18 = arith.constant 0 : index
      %16 = vector.load %arg3[%c0_17, %c0_18] : memref<32x2xf32, #tpu.memory_space<vmem>>, vector<32x2xf32>
      %cst_19 = arith.constant dense<0.000000e+00> : vector<2x2xf32>
      %17 = tpu.matmul %15, %16, %cst_19 {dimension_numbers = #tpu.dot_dimension_numbers<[1], [0], [0], [1], [0, 0, 1, 1], [], []>} : vector<2x32xf32>, vector<32x2xf32>, vector<2x2xf32> -> vector<2x2xf32>
      %c0_20 = arith.constant 0 : index
      %c0_21 = arith.constant 0 : index
      %18 = vector.load %arg4[%c0_20, %c0_21] : memref<1x2xf32, #tpu.memory_space<vmem>>, vector<1x2xf32>
      %19 = vector.broadcast %18 : vector<1x2xf32> to vector<2x2xf32>
      %20 = arith.addf %17, %19 : vector<2x2xf32>
      %cst_22 = arith.constant 0.000000e+00 : f32
      %21 = vector.broadcast %cst_22 : f32 to vector<2x2xf32>
      %22 = arith.maximumf %20, %21 : vector<2x2xf32>
      %c0_23 = arith.constant 0 : index
      %c0_24 = arith.constant 0 : index
      %23 = vector.load %arg5[%c0_23, %c0_24] : memref<2x32xf32, #tpu.memory_space<vmem>>, vector<2x32xf32>
      %cst_25 = arith.constant dense<0.000000e+00> : vector<2x32xf32>
      %24 = tpu.matmul %22, %23, %cst_25 {dimension_numbers = #tpu.dot_dimension_numbers<[1], [0], [0], [1], [0, 0, 1, 1], [], []>} : vector<2x2xf32>, vector<2x32xf32>, vector<2x32xf32> -> vector<2x32xf32>
      %c0_26 = arith.constant 0 : index
      %c0_27 = arith.constant 0 : index
      %25 = vector.load %arg6[%c0_26, %c0_27] : memref<1x32xf32, #tpu.memory_space<vmem>>, vector<1x32xf32>
      %26 = vector.broadcast %25 : vector<1x32xf32> to vector<2x32xf32>
      %27 = arith.addf %24, %26 : vector<2x32xf32>
      %28 = arith.negf %27 : vector<2x32xf32>
      %29 = math.exp %28 : vector<2x32xf32>
      %cst_28 = arith.constant 1.000000e+00 : f32
      %30 = vector.broadcast %cst_28 : f32 to vector<2x32xf32>
      %31 = arith.addf %30, %29 : vector<2x32xf32>
      %32 = arith.divf %30, %31 : vector<2x32xf32>
      %c0_29 = arith.constant 0 : index
      %c0_30 = arith.constant 0 : index
      %33 = vector.load %arg7[%c0_29, %c0_30] : memref<2x32xf32, #tpu.memory_space<vmem>>, vector<2x32xf32>
      tpu.vector_store %arg7[%c0_29, %c0_30], %32 {strides = array<i32>} : memref<2x32xf32, #tpu.memory_space<vmem>>, vector<2x32xf32>,
    } else {
    }
    return
  }
  func.func @transform_0(%arg0: i32, %arg1: i32) -> (i32, i32, i32) {
    %c0_i32 = arith.constant 0 : i32
    %c0_i32_0 = arith.constant 0 : i32
    return %arg0, %c0_i32, %arg1 : i32, i32, i32
  }
  func.func @transform_1(%arg0: i32, %arg1: i32) -> (i32, i32) {
    %c0_i32 = arith.constant 0 : i32
    %c0_i32_0 = arith.constant 0 : i32
    %c0_i32_1 = arith.constant 0 : i32
    return %c0_i32, %c0_i32_0 : i32, i32
  }
  func.func @transform_2(%arg0: i32, %arg1: i32) -> (i32, i32) {
    %c0_i32 = arith.constant 0 : i32
    %c0_i32_0 = arith.constant 0 : i32
    %c0_i32_1 = arith.constant 0 : i32
    return %c0_i32, %c0_i32_0 : i32, i32
  }
  func.func @transform_3(%arg0: i32, %arg1: i32) -> (i32, i32) {
    %c0_i32 = arith.constant 0 : i32
    %c0_i32_0 = arith.constant 0 : i32
    %c0_i32_1 = arith.constant 0 : i32
    return %c0_i32, %c0_i32_0 : i32, i32
  }
  func.func @transform_4(%arg0: i32, %arg1: i32) -> (i32, i32) {
    %c0_i32 = arith.constant 0 : i32
    %c0_i32_0 = arith.constant 0 : i32
    %c0_i32_1 = arith.constant 0 : i32
    return %c0_i32, %c0_i32_0 : i32, i32
  }
  func.func @transform_5(%arg0: i32, %arg1: i32) -> (i32, i32) {
    %c0_i32 = arith.constant 0 : i32
    %c0_i32_0 = arith.constant 0 : i32
    return %arg0, %c0_i32 : i32, i32
  }
}

</mosaic_0001>

<llo_original>
// kernel: tpu_custom_call.1
$region0: #{tpu_custom_call.1}
  #allocation0 [shape = 'u32[]', space=smem, size = 0x4, offset = 0x4, fixed_abs, tag = 'smem constant byte address 0x4 - core index']
  #allocation1 [shape = 'u32[72,128]{1,0:T(1,128)}', space=vmem, size = 0x9000, scoped, tag = 'internal scratch']
  #allocation2 [shape = 'f32[2,32,128]{2,1,0:T(8,128)}', space=vmem, size = 0x8000, scoped, tag = 'scratch operand']
  %s0 = inlined_call_operand.hbm [shape: f32[2,32,256], index: 0, kind: input, shape index: {}]
  %s1 = inlined_call_operand.vmem [shape: f32[32,2], index: 1, kind: input, shape index: {}]
  %s2 = inlined_call_operand.vmem [shape: f32[1,2], index: 2, kind: input, shape index: {}]
  %s3 = inlined_call_operand.vmem [shape: f32[2,32], index: 3, kind: input, shape index: {}]
  %s4 = inlined_call_operand.vmem [shape: f32[1,32], index: 4, kind: input, shape index: {}]
  %s5 = inlined_call_operand.hbm [shape: f32[2,32], index: 5, kind: output, shape index: {}]
  %s6 = sld [smem:[#allocation0]]
  $region42: #{tpu_custom_call.1} parent=0
    _
  %s8 = ssub.s32 1, %s6
  %s9 = scalar_select 0, %s8, %s6
  $region1: #{tpu_custom_call.1} parent=0
    #allocation3 [shape = 'u8[65536]{0}', space=vmem, size = 0x10000, scoped, tag = 'input window, operand 0, single buffered']
    #allocation4 [shape = 's32[1]{0}', space=sflag, size = 0x4, scoped, tag = 'scoped memory for tpu_custom_call.1']
    #allocation5 [shape = 's32[1]{0}', space=sflag, size = 0x4, scoped, tag = 'scoped memory for tpu_custom_call.1']
    #allocation6 [shape = 'u8[1024]{0}', space=vmem, size = 0x400, scoped, tag = 'output window, operand 0, single buffered']
    %10 = vsyncpa [#allocation4], 0
    %11 = vsyncpa [#allocation5], 0
    // Predicated region
    $region2: #{tpu_custom_call.1} parent=1 // pred_check
      _
    $region3: #{tpu_custom_call.1} parent=1 // pred_check_branch
      %13 = sbr.rel (0) target = $region5
    $region4: #{tpu_custom_call.1} parent=1 // pred_region
      %15 = vsyncadd [#allocation4], 0
      %s16 = sshll.u32 %s0, 4
      %s17 = int_to_ptr.hbm [resolvable:$true] %s16
      %s18 = sshll.u32 [#allocation3], 4
      %s19 = int_to_ptr.vmem [resolvable:$true] %s18
      %24 = dma.hbm_to_vmem [thread:$0]  %s17, 2048, %s19, [#allocation4], 256, 256, 16
    $region5: #{tpu_custom_call.1} parent=1 // pred_fallthru
      _
    // Predicated region
    $region6: #{tpu_custom_call.1} parent=1 // pred_check
      _
    $region7: #{tpu_custom_call.1} parent=1 // pred_check_branch
      %26 = sbr.rel (0) target = $region9
    $region8: #{tpu_custom_call.1} parent=1 // pred_region
      _
    $region9: #{tpu_custom_call.1} parent=1 // pred_fallthru
      _
    // Predicated region
    $region10: #{tpu_custom_call.1} parent=1 // pred_check
      _
    $region11: #{tpu_custom_call.1} parent=1 // pred_check_branch
      %28 = sbr.rel (0) target = $region13
    $region12: #{tpu_custom_call.1} parent=1 // pred_region
      _
    $region13: #{tpu_custom_call.1} parent=1 // pred_fallthru
      _
    // Predicated region
    $region14: #{tpu_custom_call.1} parent=1 // pred_check
      _
    $region15: #{tpu_custom_call.1} parent=1 // pred_check_branch
      %30 = sbr.rel (0) target = $region17
    $region16: #{tpu_custom_call.1} parent=1 // pred_region
      _
    $region17: #{tpu_custom_call.1} parent=1 // pred_fallthru
      _
    // Predicated region
    $region18: #{tpu_custom_call.1} parent=1 // pred_check
      _
    $region19: #{tpu_custom_call.1} parent=1 // pred_check_branch
      %32 = sbr.rel (0) target = $region21
    $region20: #{tpu_custom_call.1} parent=1 // pred_region
      _
    $region21: #{tpu_custom_call.1} parent=1 // pred_fallthru
      _
    // Predicated region
    $region22: #{tpu_custom_call.1} parent=1 // pred_check
      _
    $region23: #{tpu_custom_call.1} parent=1 // pred_check_branch
      %34 = sbr.rel (0) target = $region25
    $region24: #{tpu_custom_call.1} parent=1 // pred_region
      %36 = dma.done [#allocation4], 2048
    $region25: #{tpu_custom_call.1} parent=1 // pred_fallthru
      _
    %p37 = scmp.eq.s32.totalorder 0, 0
    // Predicated region
    $region26: #{tpu_custom_call.1} parent=1 // pred_check
      %p38 = pneg %p37
    $region27: #{tpu_custom_call.1} parent=1 // pred_check_branch
      %40 = sbr.rel (%p38) target = $region29
    $region28: #{tpu_custom_call.1} parent=1 // pred_region
      %41 = vst [vmem:[#allocation2] sm:$0xff] 0.0
      %42 = vst [vmem:[#allocation2 + $0x8] sm:$0xff] 0.0
      %43 = vst [vmem:[#allocation2 + $0x10] sm:$0xff] 0.0
      %44 = vst [vmem:[#allocation2 + $0x18] sm:$0xff] 0.0
      %45 = vst [vmem:[#allocation2 + $0x20] sm:$0xff] 0.0
      %46 = vst [vmem:[#allocation2 + $0x28] sm:$0xff] 0.0
      %47 = vst [vmem:[#allocation2 + $0x30] sm:$0xff] 0.0
      %48 = vst [vmem:[#allocation2 + $0x38] sm:$0xff] 0.0
    $region29: #{tpu_custom_call.1} parent=1 // pred_fallthru
      _
    %v49 = vld [vmem:[#allocation3] sm:$0xff]
    %v50 = vld [vmem:[#allocation3 + $0x10] sm:$0xff]
    %v51 = vld [vmem:[#allocation3 + $0x20] sm:$0xff]
    %v52 = vld [vmem:[#allocation3 + $0x30] sm:$0xff]
    %v53 = vld [vmem:[#allocation3 + $0x40] sm:$0xff]
    %v54 = vld [vmem:[#allocation3 + $0x50] sm:$0xff]
    %v55 = vld [vmem:[#allocation3 + $0x60] sm:$0xff]
    %v56 = vld [vmem:[#allocation3 + $0x70] sm:$0xff]
    %v57 = vld [vmem:[#allocation3 + $0x8] sm:$0xff]
    %v58 = vld [vmem:[#allocation3 + $0x18] sm:$0xff]
    %v59 = vld [vmem:[#allocation3 + $0x28] sm:$0xff]
    %v60 = vld [vmem:[#allocation3 + $0x38] sm:$0xff]
    %v61 = vld [vmem:[#allocation3 + $0x48] sm:$0xff]
    %v62 = vld [vmem:[#allocation3 + $0x58] sm:$0xff]
    %v63 = vld [vmem:[#allocation3 + $0x68] sm:$0xff]
    %v64 = vld [vmem:[#allocation3 + $0x78] sm:$0xff]
    %v65 = vadd.f32 %v49, %v57
    %v66 = vadd.f32 %v50, %v58
    %v67 = vadd.f32 %v51, %v59
    %v68 = vadd.f32 %v52, %v60
    %v69 = vadd.f32 %v53, %v61
    %v70 = vadd.f32 %v54, %v62
    %v71 = vadd.f32 %v55, %v63
    %v72 = vadd.f32 %v56, %v64
    %v73 = vld [vmem:[#allocation2] sm:$0xff]
    %v74 = vld [vmem:[#allocation2 + $0x8] sm:$0xff]
    %v75 = vld [vmem:[#allocation2 + $0x10] sm:$0xff]
    %v76 = vld [vmem:[#allocation2 + $0x18] sm:$0xff]
    %v77 = vld [vmem:[#allocation2 + $0x20] sm:$0xff]
    %v78 = vld [vmem:[#allocation2 + $0x28] sm:$0xff]
    %v79 = vld [vmem:[#allocation2 + $0x30] sm:$0xff]
    %v80 = vld [vmem:[#allocation2 + $0x38] sm:$0xff]
    %v81 = vadd.f32 %v73, %v65
    %v82 = vadd.f32 %v74, %v66
    %v83 = vadd.f32 %v75, %v67
    %v84 = vadd.f32 %v76, %v68
    %v85 = vadd.f32 %v77, %v69
    %v86 = vadd.f32 %v78, %v70
    %v87 = vadd.f32 %v79, %v71
    %v88 = vadd.f32 %v80, %v72
    %89 = vst [vmem:[#allocation2] sm:$0xff] %v81
    %90 = vst [vmem:[#allocation2 + $0x8] sm:$0xff] %v82
    %91 = vst [vmem:[#allocation2 + $0x10] sm:$0xff] %v83
    %92 = vst [vmem:[#allocation2 + $0x18] sm:$0xff] %v84
    %93 = vst [vmem:[#allocation2 + $0x20] sm:$0xff] %v85
    %94 = vst [vmem:[#allocation2 + $0x28] sm:$0xff] %v86
    %95 = vst [vmem:[#allocation2 + $0x30] sm:$0xff] %v87
    %96 = vst [vmem:[#allocation2 + $0x38] sm:$0xff] %v88
    // Predicated region
    $region30: #{tpu_custom_call.1} parent=1 // pred_check
      %p97 = pneg %p37
    $region31: #{tpu_custom_call.1} parent=1 // pred_check_branch
      %99 = sbr.rel (%p97) target = $region33
    $region32: #{tpu_custom_call.1} parent=1 // pred_region
      %v100 = vld [vmem:[#allocation2] sm:$0xff]
      %v101 = vld [vmem:[#allocation2 + $0x8] sm:$0xff]
      %v102 = vld [vmem:[#allocation2 + $0x10] sm:$0xff]
      %v103 = vld [vmem:[#allocation2 + $0x18] sm:$0xff]
      %v104 = vld [vmem:[#allocation2 + $0x20] sm:$0xff]
      %v105 = vld [vmem:[#allocation2 + $0x28] sm:$0xff]
      %v106 = vld [vmem:[#allocation2 + $0x30] sm:$0xff]
      %v107 = vld [vmem:[#allocation2 + $0x38] sm:$0xff]
      %108 = vadd.xlane.f32.xlu0 %v100
      %v109 = vpop.xlane.xlu0 %108
      %110 = vadd.xlane.f32.xlu0 %v101
      %v111 = vpop.xlane.xlu0 %110
      %112 = vadd.xlane.f32.xlu0 %v102
      %v113 = vpop.xlane.xlu0 %112
      %114 = vadd.xlane.f32.xlu0 %v103
      %v115 = vpop.xlane.xlu0 %114
      %116 = vadd.xlane.f32.xlu0 %v104
      %v117 = vpop.xlane.xlu0 %116
      %118 = vadd.xlane.f32.xlu0 %v105
      %v119 = vpop.xlane.xlu0 %118
      %120 = vadd.xlane.f32.xlu0 %v106
      %v121 = vpop.xlane.xlu0 %120
      %122 = vadd.xlane.f32.xlu0 %v107
      %v123 = vpop.xlane.xlu0 %122
      %v124 = vmul.f32 %v109, 0.00390625
      %v125 = vmul.f32 %v111, 0.00390625
      %v126 = vmul.f32 %v113, 0.00390625
      %v127 = vmul.f32 %v115, 0.00390625
      %v128 = vmul.f32 %v117, 0.00390625
      %v129 = vmul.f32 %v119, 0.00390625
      %v130 = vmul.f32 %v121, 0.00390625
      %v131 = vmul.f32 %v123, 0.00390625
      %v132 = vld [vmem:[%s1] sm:$0xff]
      %v133 = vld [vmem:[%s1 + $0x8] sm:$0xff]
      %v134 = vld [vmem:[%s1 + $0x10] sm:$0xff]
      %v135 = vld [vmem:[%s1 + $0x18] sm:$0xff]
      %v136 = vld [vmem:[%s2] sm:$0x1]
      %v138 = vperm.slane %v136, 0
      %v148 = vlaneseq
      %v149 = vand.u32 %v148, 127
      %v150 = vperm.slane %v124, %v149
      %v151 = vadd.s32 %v149, 4294967288
      %v152 = vperm.slane %v125, %v151
      %vm153 = vcmask 130112
      %v154 = vsel %vm153, %v152, %v150
      %v155 = vadd.s32 %v149, 4294967280
      %v156 = vperm.slane %v126, %v155
      %vm157 = vcmask 195712
      %v158 = vsel %vm157, %v156, %v154
      %v159 = vadd.s32 %v149, 4294967272
      %v160 = vperm.slane %v127, %v159
      %vm161 = vcmask 261312
      %v162 = vsel %vm161, %v160, %v158
      %v163 = vperm.slane %v128, %v149
      %v164 = vperm.slane %v129, %v151
      %v165 = vsel %vm153, %v164, %v163
      %v166 = vperm.slane %v130, %v155
      %v167 = vsel %vm157, %v166, %v165
      %v168 = vperm.slane %v131, %v159
      %v169 = vsel %vm161, %v168, %v167
      %vm170 = vcmask 1041409
      %v171 = vsel %vm170, %v169, %v162
      %vm172 = vcmask 261120
      %v173 = vsel %vm172, %v171, 0
      %175 = vmatpush.msra.mxu0 0.0
      %176 = vmatpush.msra.mxu0 0.0
      %177 = vmatpush.msra.mxu0 0.0
      %178 = vmatpush.msra.mxu0 0.0
      %179 = vmatpush.msra.mxu0 0.0
      %180 = vmatpush.msra.mxu0 0.0
      %181 = vmatpush.msra.mxu0 0.0
      %182 = vmatpush.msra.mxu0 0.0
      %183 = vmatpush.msra.mxu0 0.0
      %184 = vmatpush.msra.mxu0 0.0
      %185 = vmatpush.msra.mxu0 0.0
      %186 = vmatpush.msra.mxu0 0.0
      %187 = vmatpush.msra.mxu0 %v135
      %188 = vmatpush.msra.mxu0 %v134
      %189 = vmatpush.msra.mxu0 %v133
      %190 = vmatpush.msra.mxu0 %v132
      %191 = vmatmul.f32.gmra.mxu0 %v173
      %v192 = vpop.f32.mrf.mxu0
      %v193 = vadd.f32 %v138, %v192
      %194 = vdwg.mxu0
      %v195 = vmax.f32 %v193, 0.0
      %v196 = vld [vmem:[%s3] sm:$0x3]
      %v197 = vld [vmem:[%s4] sm:$0x1]
      %v199 = vperm.slane %v197, 0
      %vm201 = vcmask 15360
      %v203 = vsel %vm201, %v195, 0
      %vm205 = vcmask 1041408
      %v207 = vsel %vm205, %v196, 0
      %209 = vmatpush.msra.mxu0 0.0
      %210 = vmatpush.msra.mxu0 0.0
      %211 = vmatpush.msra.mxu0 0.0
      %212 = vmatpush.msra.mxu0 0.0
      %213 = vmatpush.msra.mxu0 0.0
      %214 = vmatpush.msra.mxu0 0.0
      %215 = vmatpush.msra.mxu0 0.0
      %216 = vmatpush.msra.mxu0 0.0
      %217 = vmatpush.msra.mxu0 0.0
      %218 = vmatpush.msra.mxu0 0.0
      %219 = vmatpush.msra.mxu0 0.0
      %220 = vmatpush.msra.mxu0 0.0
      %221 = vmatpush.msra.mxu0 0.0
      %222 = vmatpush.msra.mxu0 0.0
      %223 = vmatpush.msra.mxu0 0.0
      %224 = vmatpush.msra.mxu0 %v207
      %225 = vmatmul.f32.gmra.mxu0 %v203
      %v226 = vpop.f32.mrf.mxu0
      %v227 = vadd.f32 %v199, %v226
      %228 = vdwg.mxu0
      %v229 = vxor.u32 %v227, 2147483648
      %v230 = vmul.f32 %v229, 1.442695
      %v231 = vpow.pop %v230
      %v232 = vadd.f32 %v231, 1.0
      %v233 = vrcp.pop %v232
      %v234 = vmul.f32 %v232, %v233
      %v235 = vsub.f32 1.0, %v234
      %v236 = vmul.f32 %v233, %v235
      %v237 = vadd.f32 %v233, %v236
      %vm238 = vweird.f32 %v232
      %vm239 = vweird.f32 %v233
      %vm240 = vmor %vm238, %vm239
      %v241 = vsel %vm240, %v233, %v237
      %v242 = vand.u32 2147483647, %v232
      %vm243 = vcmp.eq.f32.partialorder %v242, 8.507059e+37
      %v244 = vand.u32 %v232, 2147483648
      %v245 = vor.u32 1.1754944e-38, %v244
      %v246 = vsel %vm243, %v245, %v241
      %v247 = vmul.f32 1.0, %v246
      %vm248 = vcmask 254976
      %249 = vst.msk [vmem:[#allocation6] sm:$0x3] %vm248, %v247
    $region33: #{tpu_custom_call.1} parent=1 // pred_fallthru
      _
    // Predicated region
    $region34: #{tpu_custom_call.1} parent=1 // pred_check
      _
    $region35: #{tpu_custom_call.1} parent=1 // pred_check_branch
      %251 = sbr.rel (0) target = $region37
    $region36: #{tpu_custom_call.1} parent=1 // pred_region
      %253 = vsyncadd [#allocation5], 0
      %s255 = sshll.u32 [#allocation6], 4
      %s256 = int_to_ptr.vmem [resolvable:$true] %s255
      %s257 = sshll.u32 %s5, 4
      %s258 = int_to_ptr.hbm [resolvable:$true] %s257
      %260 = dma.vmem_to_hbm [thread:$0]  %s256, 32, %s258, [#allocation5]
    $region37: #{tpu_custom_call.1} parent=1 // pred_fallthru
      _
    // Predicated region
    $region38: #{tpu_custom_call.1} parent=1 // pred_check
      _
    $region39: #{tpu_custom_call.1} parent=1 // pred_check_branch
      %262 = sbr.rel (0) target = $region41
    $region40: #{tpu_custom_call.1} parent=1 // pred_region
      %264 = dma.done [#allocation5], 32
    $region41: #{tpu_custom_call.1} parent=1 // pred_fallthru
      _
    %265 = vsyncpa [#allocation4], 1
    %266 = vsyncpa [#allocation5], 1

</llo_original>
